<compile_context>
chip_gen: v5e
topology: v5e:2x2
jax: 0.10.0
libtpu: 0.0.40
codegen_flags: <defaults>
</compile_context>

<pallas_src>
import functools

import jax
import jax.numpy as jnp
from jax.experimental import pallas as pl
from jax.experimental.pallas import tpu as pltpu

_LANE = 128
_SUB = 8


def _round_up(x, m):
    return (x + m - 1) // m * m


def _choose_tiles(n):
    """Row / column tiles for the [N, N] aggregation matmul."""
    if n <= 512:
        n_pad = _round_up(n, _SUB)
        return n_pad, n_pad, n_pad          # single full-extent block
    tm, tk = 512, 512                       # multiples of (8, 128); feeds 4x128 / 2x256 MXUs
    n_pad = _round_up(n, max(tm, tk))
    return n_pad, tm, tk


# --------------------------------------------------------------------------
# Kernel 1: feature transform  XW = X @ W  (tiny; run once, row-tiled)
# --------------------------------------------------------------------------
def _xw_kernel(x_ref, w_ref, o_ref):
    xw = jnp.dot(
        x_ref[...].astype(jnp.float32),
        w_ref[...].astype(jnp.float32),
        preferred_element_type=jnp.float32,
    )
    o_ref[...] = xw.astype(o_ref.dtype)


def _feature_transform(x, w, tm):
    n_pad, k_dim = x.shape
    f_pad = w.shape[1]
    grid = (n_pad // tm,)
    return pl.pallas_call(
        _xw_kernel,
        out_shape=jax.ShapeDtypeStruct((n_pad, f_pad), jnp.bfloat16),
        grid_spec=pltpu.PrefetchScalarGridSpec(
            num_scalar_prefetch=0,
            grid=grid,
            in_specs=[
                pl.BlockSpec((tm, k_dim), lambda i: (i, 0)),
                pl.BlockSpec((k_dim, f_pad), lambda i: (0, 0)),
            ],
            out_specs=pl.BlockSpec((tm, f_pad), lambda i: (i, 0)),
        ),
        compiler_params=pltpu.CompilerParams(dimension_semantics=("parallel",)),
        cost_estimate=pl.CostEstimate(
            flops=2 * n_pad * k_dim * f_pad,
            transcendentals=0,
            bytes_accessed=int(x.size * x.dtype.itemsize
                               + w.size * w.dtype.itemsize
                               + n_pad * f_pad * 2),
        ),
    )(x, w)


# --------------------------------------------------------------------------
# Kernel 2: tiled aggregation  Z = A_hat @ XW + b, then activation
# --------------------------------------------------------------------------
def _agg_kernel(a_ref, xw_ref, b_ref, o_ref, acc_ref, *, activation, valid_cols):
    k = pl.program_id(1)

    @pl.when(k == 0)
    def _():
        acc_ref[...] = jnp.zeros_like(acc_ref)

    # bf16 x bf16 -> f32 accumulate on the MXU
    acc_ref[...] += jnp.dot(a_ref[...], xw_ref[...],
                            preferred_element_type=jnp.float32)

    @pl.when(k == pl.num_programs(1) - 1)
    def _():
        z = acc_ref[...] + b_ref[...]           # bias AFTER propagation (PyG GCNConv)
        if activation == "relu":
            o_ref[...] = jnp.maximum(z, 0.0).astype(o_ref.dtype)
        else:  # masked log_softmax over the first `valid_cols` lanes
            col = jax.lax.broadcasted_iota(jnp.int32, z.shape, 1)
            valid = col < valid_cols
            zm = jnp.where(valid, z, -jnp.inf)
            m = jnp.max(zm, axis=1, keepdims=True)
            s = z - m
            sumexp = jnp.sum(jnp.where(valid, jnp.exp(s), 0.0),
                             axis=1, keepdims=True)
            o_ref[...] = (s - jnp.log(sumexp)).astype(o_ref.dtype)


def _aggregate(a, xw, b, tm, tk, *, activation, out_dtype, valid_cols=0):
    n_pad = a.shape[0]
    f_pad = xw.shape[1]
    grid = (n_pad // tm, n_pad // tk)

    kernel = functools.partial(_agg_kernel, activation=activation,
                               valid_cols=valid_cols)
    flops = 2 * n_pad * n_pad * f_pad
    trans = n_pad * f_pad if activation == "log_softmax" else 0
    bytes_accessed = int(
        a.size * 2                              # a_hat (bf16), read once
        + (n_pad // tm) * n_pad * f_pad * 2     # xw re-streamed per row tile
        + n_pad * f_pad * jnp.dtype(out_dtype).itemsize
    )

    return pl.pallas_call(
        kernel,
        out_shape=jax.ShapeDtypeStruct((n_pad, f_pad), out_dtype),
        grid_spec=pltpu.PrefetchScalarGridSpec(
            num_scalar_prefetch=0,
            grid=grid,
            in_specs=[
                pl.BlockSpec((tm, tk), lambda i, k: (i, k)),
                pl.BlockSpec((tk, f_pad), lambda i, k: (k, 0)),
                pl.BlockSpec((1, f_pad), lambda i, k: (0, 0)),
            ],
            out_specs=pl.BlockSpec((tm, f_pad), lambda i, k: (i, 0)),
            scratch_shapes=[pltpu.VMEM((tm, f_pad), jnp.float32)],
        ),
        compiler_params=pltpu.CompilerParams(
            dimension_semantics=("parallel", "arbitrary")),
        cost_estimate=pl.CostEstimate(flops=flops,
                                      transcendentals=trans,
                                      bytes_accessed=bytes_accessed),
    )(a, xw, b)


# --------------------------------------------------------------------------
# Forward wrapper
# --------------------------------------------------------------------------
def gcn_forward(a_hat, x, w1, b1, w2, b2):
    n, c_in = x.shape
    h_dim = w1.shape[1]
    c_out = w2.shape[1]

    n_pad, tm, tk = _choose_tiles(n)
    h_pad = _round_up(max(h_dim, _LANE), _LANE)
    c_pad = _round_up(max(c_out, _LANE), _LANE)

    # pad node count + feature lanes (lane-dense stores; slice back at the end)
    a_p = jnp.zeros((n_pad, n_pad), jnp.bfloat16)
    a_p = a_p.at[:n, :n].set(a_hat.astype(jnp.bfloat16))
    x_p = jnp.zeros((n_pad, c_in), jnp.float32).at[:n, :].set(x)
    w1_p = jnp.zeros((c_in, h_pad), jnp.float32).at[:, :h_dim].set(w1)
    b1_p = jnp.zeros((1, h_pad), jnp.float32).at[:, :h_dim].set(b1)
    w2_p = jnp.zeros((h_pad, c_pad), jnp.float32).at[:h_dim, :c_out].set(w2)
    b2_p = jnp.zeros((1, c_pad), jnp.float32).at[:, :c_out].set(b2)

    # ---- layer 1: A_hat @ (X W1) + b1, ReLU ----
    xw1 = _feature_transform(x_p, w1_p, tm)                      # [n_pad, h_pad] bf16
    h = _aggregate(a_p, xw1, b1_p, tm, tk,
                   activation="relu", out_dtype=jnp.bfloat16)    # [n_pad, h_pad] bf16

    # F.dropout(x, training=self.training): identity in eval mode.
    # TODO(synk): training-mode dropout (pltpu.prng_random_bits mask) not emitted here.

    # ---- layer 2: A_hat @ (H W2) + b2, log_softmax ----
    hw2 = _feature_transform(h, w2_p, tm)                        # [n_pad, c_pad] bf16
    z = _aggregate(a_p, hw2, b2_p, tm, tk,
                   activation="log_softmax", out_dtype=jnp.float32,
                   valid_cols=c_out)                             # [n_pad, c_pad] f32

    return z[:n, :c_out]


# --------------------------------------------------------------------------
# Glue: adjacency normalization, init, reference
# --------------------------------------------------------------------------
def normalized_adjacency(edge_index, num_nodes):
    """Dense GCN normalization D^-1/2 (A + I) D^-1/2 (PyG-style).

    Duplicate edges scatter-add (like PyG message passing); existing self-loops
    are dropped and every node gets exactly one weight-1 self-loop
    (add_remaining_self_loops semantics).
    """
    src, dst = edge_index[0], edge_index[1]
    w = jnp.where(src == dst, 0.0, 1.0)                 # drop pre-existing self-loops
    a = jnp.zeros((num_nodes, num_nodes), jnp.float32)
    a = a.at[dst, src].add(w)                           # scatter-add (duplicates sum)
    a = a + jnp.eye(num_nodes, dtype=jnp.float32)       # one self-loop per node
    deg = jnp.sum(a, axis=1)
    dinv = jnp.where(deg > 0, jax.lax.rsqrt(deg), 0.0)
    return dinv[:, None] * a * dinv[None, :]


def glorot(key, shape):
    fan_in, fan_out = shape
    limit = jnp.sqrt(6.0 / (fan_in + fan_out))
    return jax.random.uniform(key, shape, jnp.float32, -limit, limit)


def gcn_reference(a_hat, x, w1, b1, w2, b2):
    h = jnp.maximum(a_hat @ (x @ w1) + b1, 0.0)
    z = a_hat @ (h @ w2) + b2
    return jax.nn.log_softmax(z, axis=1)


if __name__ == "__main__":
    key = jax.random.PRNGKey(0)
    k_x, k_e, k_w1, k_w2 = jax.random.split(key, 4)

    num_nodes = 16
    in_channels = 8
    hidden = 16
    out_channels = 4
    num_edges = 32

    # deterministic synthetic graph + features
    x = jax.random.normal(k_x, (num_nodes, in_channels), jnp.float32)
    edge_index = jax.random.randint(k_e, (2, num_edges), 0, num_nodes, jnp.int32)
    a_hat = normalized_adjacency(edge_index, num_nodes)

    # deterministic parameters (GCNConv: glorot weight, zero bias)
    w1 = glorot(k_w1, (in_channels, hidden))
    b1 = jnp.zeros((1, hidden), jnp.float32)
    w2 = glorot(k_w2, (hidden, out_channels))
    b2 = jnp.zeros((1, out_channels), jnp.float32)

    out = gcn_forward(a_hat, x, w1, b1, w2, b2)
    out = jax.block_until_ready(out)

    # sanity: shape + log_softmax rows sum (in prob space) to 1
    assert out.shape == (num_nodes, out_channels)
    assert jnp.allclose(jnp.sum(jnp.exp(out), axis=1), 1.0, atol=1e-4)

    # numerical check vs pure-JAX f32 reference (bf16 aggregation -> loose tol)
    ref = gcn_reference(a_hat, x, w1, b1, w2, b2)
    assert jnp.allclose(out, ref, atol=5e-2, rtol=5e-2), float(jnp.max(jnp.abs(out - ref)))

    print("KERNEL_OK")
</pallas_src>

<mosaic_0001>
module attributes {stable_mosaic.version = 11 : i64} {
  func.func @_xw_kernel(%arg0: i32, %arg1: memref<16x8xf32, #tpu.memory_space<vmem>>, %arg2: memref<8x128xf32, #tpu.memory_space<vmem>>, %arg3: memref<16x128xbf16, #tpu.memory_space<vmem>>) attributes {dimension_semantics = [#tpu.dimension_semantics<parallel>], iteration_bounds = array<i64: 1>, scalar_prefetch = 0 : i64, scratch_operands = 0 : i64, tpu.core_type = #tpu.core_type<tc>, window_params = [{transform_indices = @transform_0, window_bounds = array<i64: 16, 8>}, {pipeline_mode = #tpu.pipeline_mode<synchronous>, transform_indices = @transform_1, window_bounds = array<i64: 8, 128>}, {transform_indices = @transform_2, window_bounds = array<i64: 16, 128>}]} {
    %c0 = arith.constant 0 : index
    %c0_0 = arith.constant 0 : index
    %0 = vector.load %arg1[%c0, %c0_0] : memref<16x8xf32, #tpu.memory_space<vmem>>, vector<16x8xf32>
    %c0_1 = arith.constant 0 : index
    %c0_2 = arith.constant 0 : index
    %1 = vector.load %arg2[%c0_1, %c0_2] : memref<8x128xf32, #tpu.memory_space<vmem>>, vector<8x128xf32>
    %cst = arith.constant dense<0.000000e+00> : vector<16x128xf32>
    %2 = tpu.matmul %0, %1, %cst {dimension_numbers = #tpu.dot_dimension_numbers<[1], [0], [0], [1], [0, 0, 1, 1], [], []>} : vector<16x8xf32>, vector<8x128xf32>, vector<16x128xf32> -> vector<16x128xf32>
    %3 = arith.truncf %2 : vector<16x128xf32> to vector<16x128xbf16>
    %c0_3 = arith.constant 0 : index
    %c0_4 = arith.constant 0 : index
    %4 = vector.load %arg3[%c0_3, %c0_4] : memref<16x128xbf16, #tpu.memory_space<vmem>>, vector<16x128xbf16>
    tpu.vector_store %arg3[%c0_3, %c0_4], %3 {strides = array<i32>} : memref<16x128xbf16, #tpu.memory_space<vmem>>, vector<16x128xbf16>,
    return
  }
  func.func @transform_0(%arg0: i32) -> (i32, i32) {
    %c0_i32 = arith.constant 0 : i32
    %c0_i32_0 = arith.constant 0 : i32
    return %arg0, %c0_i32 : i32, i32
  }
  func.func @transform_1(%arg0: i32) -> (i32, i32) {
    %c0_i32 = arith.constant 0 : i32
    %c0_i32_0 = arith.constant 0 : i32
    %c0_i32_1 = arith.constant 0 : i32
    return %c0_i32, %c0_i32_0 : i32, i32
  }
  func.func @transform_2(%arg0: i32) -> (i32, i32) {
    %c0_i32 = arith.constant 0 : i32
    %c0_i32_0 = arith.constant 0 : i32
    return %arg0, %c0_i32 : i32, i32
  }
}

</mosaic_0001>

<llo_original>
// kernel: tpu_custom_call.1
$region0: #{tpu_custom_call.1}
  #allocation0 [shape = 'u32[]', space=smem, size = 0x4, offset = 0x4, fixed_abs, tag = 'smem constant byte address 0x4 - core index']
  #allocation1 [shape = 'u32[72,128]{1,0:T(1,128)}', space=vmem, size = 0x9000, scoped, tag = 'internal scratch']
  %s0 = inlined_call_operand.vmem [shape: f32[16,8], index: 0, kind: input, shape index: {}]
  %s1 = inlined_call_operand.vmem [shape: f32[8,128], index: 1, kind: input, shape index: {}]
  %s2 = inlined_call_operand.hbm [shape: bf16[16,128], index: 2, kind: output, shape index: {}]
  %s3 = sld [smem:[#allocation0]]
  $region18: #{tpu_custom_call.1} parent=0
    _
  %s5 = ssub.s32 1, %s3
  %s6 = scalar_select 0, %s5, %s3
  $region1: #{tpu_custom_call.1} parent=0
    #allocation2 [shape = 'u8[4096]{0}', space=vmem, size = 0x1000, scoped, tag = 'output window, operand 0, single buffered']
    #allocation3 [shape = 's32[1]{0}', space=sflag, size = 0x4, scoped, tag = 'scoped memory for tpu_custom_call.1']
    %7 = vsyncpa [#allocation3], 0
    // Predicated region
    $region2: #{tpu_custom_call.1} parent=1 // pred_check
      _
    $region3: #{tpu_custom_call.1} parent=1 // pred_check_branch
      %9 = sbr.rel (0) target = $region5
    $region4: #{tpu_custom_call.1} parent=1 // pred_region
      _
    $region5: #{tpu_custom_call.1} parent=1 // pred_fallthru
      _
    // Predicated region
    $region6: #{tpu_custom_call.1} parent=1 // pred_check
      _
    $region7: #{tpu_custom_call.1} parent=1 // pred_check_branch
      %11 = sbr.rel (0) target = $region9
    $region8: #{tpu_custom_call.1} parent=1 // pred_region
      _
    $region9: #{tpu_custom_call.1} parent=1 // pred_fallthru
      _
    %v12 = vld [vmem:[%s0] sm:$0xff]
    %v13 = vld [vmem:[%s0 + $0x8] sm:$0xff]
    %v14 = vld [vmem:[%s1] sm:$0xff]
    %vm15 = vcmask 64512
    %v17 = vsel %vm15, %v12, 0
    %v20 = vsel %vm15, %v13, 0
    %22 = vmatpush.msra.mxu0 0.0
    %23 = vmatpush.msra.mxu0 0.0
    %24 = vmatpush.msra.mxu0 0.0
    %25 = vmatpush.msra.mxu0 0.0
    %26 = vmatpush.msra.mxu0 0.0
    %27 = vmatpush.msra.mxu0 0.0
    %28 = vmatpush.msra.mxu0 0.0
    %29 = vmatpush.msra.mxu0 0.0
    %30 = vmatpush.msra.mxu0 0.0
    %31 = vmatpush.msra.mxu0 0.0
    %32 = vmatpush.msra.mxu0 0.0
    %33 = vmatpush.msra.mxu0 0.0
    %34 = vmatpush.msra.mxu0 0.0
    %35 = vmatpush.msra.mxu0 0.0
    %36 = vmatpush.msra.mxu0 0.0
    %37 = vmatpush.msra.mxu0 %v14
    %38 = vmatmul.f32.gmra.mxu0 %v17
    %v39 = vpop.f32.mrf.mxu0
    %v40 = vadd.f32 0.0, %v39
    %41 = vmatmul.f32.gmra.mxu0 %v20
    %v42 = vpop.f32.mrf.mxu0
    %v43 = vadd.f32 0.0, %v42
    %44 = vdwg.mxu0
    %v45 = vpack.c.bf16 %v40, %v40
    %v46 = vpack.c.bf16 %v43, %v43
    %47 = vst [vmem:[#allocation2] sm:$0xf] %v45
    %48 = vst [vmem:[#allocation2 + $0x4] sm:$0xf] %v46
    // Predicated region
    $region10: #{tpu_custom_call.1} parent=1 // pred_check
      _
    $region11: #{tpu_custom_call.1} parent=1 // pred_check_branch
      %50 = sbr.rel (0) target = $region13
    $region12: #{tpu_custom_call.1} parent=1 // pred_region
      %52 = vsyncadd [#allocation3], 0
      %s53 = sshll.u32 [#allocation2], 4
      %s54 = int_to_ptr.vmem [resolvable:$true] %s53
      %s55 = sshll.u32 %s2, 4
      %s56 = int_to_ptr.hbm [resolvable:$true] %s55
      %61 = dma.vmem_to_hbm [thread:$0]  %s54, 128, %s56, [#allocation3], 64, 64, 4
    $region13: #{tpu_custom_call.1} parent=1 // pred_fallthru
      _
    // Predicated region
    $region14: #{tpu_custom_call.1} parent=1 // pred_check
      _
    $region15: #{tpu_custom_call.1} parent=1 // pred_check_branch
      %63 = sbr.rel (0) target = $region17
    $region16: #{tpu_custom_call.1} parent=1 // pred_region
      %65 = dma.done [#allocation3], 128
    $region17: #{tpu_custom_call.1} parent=1 // pred_fallthru
      _
    %66 = vsyncpa [#allocation3], 1

</llo_original>
